<compile_context>
chip_gen: v7x
topology: tpu7x:2x2x1
jax: 0.10.0
libtpu: 0.0.40
codegen_flags: <defaults>
</compile_context>

<pallas_src>
import functools

import jax
import jax.numpy as jnp
from jax.experimental import pallas as pl
from jax.experimental.pallas import tpu as pltpu


def _copy_kernel(x_ref, o_ref):
    # Pure lane-dense block copy: all reshaping lives in the (free) wrapper
    # reshapes and the BlockSpec tiling.
    o_ref[...] = x_ref[...]


def _sublane_multiple(dtype):
    # Native packed-sublane count per vreg row-group.
    itemsize = jnp.dtype(dtype).itemsize
    return {4: 8, 2: 16, 1: 32}.get(itemsize, 8)


def _flat_view_shape(total):
    """Row-rich, lane-dense 2-D view (rows, L).

    L is a multiple of 128 that divides `total` (largest such value <= 4096),
    so each (tr, L) block is one fully contiguous HBM slab and the lane dim is
    always unmasked/full-width.  Fallback: a single row of `total` lanes.
    """
    for L in range(4096, 127, -128):
        if total % L == 0:
            return total // L, L
    return 1, total


def _pick_tiles(R, L, dtype, max_block_bytes):
    """Pick (tr, tc) tile sizes that never exceed max_block_bytes per buffer."""
    itemsize = jnp.dtype(dtype).itemsize
    sub = _sublane_multiple(dtype)
    row_unit = min(R, sub)  # clamp to R when R < sublane multiple (no padding)

    # Lane tile: full extent if a row_unit-row block fits the budget; else the
    # largest multiple of 128 such that (row_unit, tc) stays within budget.
    if row_unit * L * itemsize <= max_block_bytes:
        tc = L
    else:
        tc = max(128, (max_block_bytes // (row_unit * itemsize * 128)) * 128)

    # Row tile: as many rows as fit the budget, rounded down to the sublane
    # multiple (never rounded UP past the budget -- that was the old bug).
    rows_fit = max(row_unit, max_block_bytes // (tc * itemsize))
    if rows_fit >= R:
        tr = R
    else:
        tr = max(sub, (rows_fit // sub) * sub)
    return tr, tc


@functools.partial(jax.jit, static_argnames=("upscale_factor",))
def pixel_shuffle(x, upscale_factor=2):
    # The reference module hard-codes factor 2 in its forward pass
    # (c_out = C // 2, w_new = 2 * W); guard against silent misuse.
    assert upscale_factor == 2, "module forward hard-codes an upscale factor of 2"
    N, C, W = x.shape
    assert C % 2 == 0, "channel dim must be even"
    C_out, W_out = C // 2, 2 * W

    itemsize = jnp.dtype(x.dtype).itemsize
    total = N * C * W

    # Free (metadata-only under jit) reshape to a row-rich lane-dense view.
    # The contiguous byte layout of (N, C, W), (R, L) and (N, C//2, 2*W) is
    # identical, so a plain copy of this view implements PixelShuffle exactly.
    R, L = _flat_view_shape(total)
    x2d = x.reshape(R, L)

    # ~4 MiB per buffer works on v5e (2-4 MiB sweet spot), v6e (4-8 MiB) and
    # v7x (4-6 MiB, 64 MiB physical VMEM).
    max_block_bytes = 4 << 20
    tr, tc = _pick_tiles(R, L, x.dtype, max_block_bytes)
    grid = (pl.cdiv(R, tr), pl.cdiv(L, tc))

    # in + out, each double-buffered -> 4 live buffers; add headroom for
    # compiler-internal scratch.  Explicit so v5e's 16 MiB default scoped
    # limit never bites and we stay far below v7x's 64 MiB physical VMEM.
    block_bytes = tr * tc * itemsize
    vmem_limit = min(max(4 * block_bytes + (4 << 20), 16 << 20), 48 << 20)

    out2d = pl.pallas_call(
        _copy_kernel,
        out_shape=jax.ShapeDtypeStruct((R, L), x.dtype),
        grid_spec=pltpu.PrefetchScalarGridSpec(
            num_scalar_prefetch=0,
            grid=grid,
            in_specs=[pl.BlockSpec((tr, tc), lambda i, j: (i, j))],
            out_specs=pl.BlockSpec((tr, tc), lambda i, j: (i, j)),
        ),
        compiler_params=pltpu.CompilerParams(
            dimension_semantics=("parallel", "parallel"),
            vmem_limit_bytes=vmem_limit,
        ),
        cost_estimate=pl.CostEstimate(
            flops=0,
            transcendentals=0,
            bytes_accessed=2 * total * itemsize,
        ),
    )(x2d)

    # Free reshape to the module's output shape.
    return out2d.reshape(N, C_out, W_out)


if __name__ == "__main__":
    key = jax.random.PRNGKey(0)
    # Small 3-D input consistent with the module's forward: (N, C, W)
    N, C, W = 2, 4, 16
    x = jax.random.normal(key, (N, C, W), dtype=jnp.float32)

    out = pixel_shuffle(x, upscale_factor=2)
    out = jax.block_until_ready(out)

    # Reference: contiguous reshape (identical to torch .view(n, c//2, 2*w))
    ref = x.reshape(N, C // 2, 2 * W)
    assert out.shape == (N, C // 2, 2 * W), out.shape
    assert jnp.allclose(out, ref), "mismatch vs reshape reference"

    print("KERNEL_OK")
</pallas_src>

<mosaic_0001>
module attributes {stable_mosaic.version = 11 : i64} {
  func.func @_copy_kernel(%arg0: i32, %arg1: i32, %arg2: memref<1x128xf32, #tpu.memory_space<vmem>>, %arg3: memref<1x128xf32, #tpu.memory_space<vmem>>) attributes {dimension_semantics = [#tpu.dimension_semantics<parallel>, #tpu.dimension_semantics<parallel>], iteration_bounds = array<i64: 1, 1>, scalar_prefetch = 0 : i64, scratch_operands = 0 : i64, tpu.core_type = #tpu.core_type<tc>, window_params = [{transform_indices = @transform_0, window_bounds = array<i64: 1, 128>}, {transform_indices = @transform_1, window_bounds = array<i64: 1, 128>}]} {
    %c0 = arith.constant 0 : index
    %c0_0 = arith.constant 0 : index
    %0 = vector.load %arg2[%c0, %c0_0] : memref<1x128xf32, #tpu.memory_space<vmem>>, vector<1x128xf32>
    %c0_1 = arith.constant 0 : index
    %c0_2 = arith.constant 0 : index
    %1 = vector.load %arg3[%c0_1, %c0_2] : memref<1x128xf32, #tpu.memory_space<vmem>>, vector<1x128xf32>
    tpu.vector_store %arg3[%c0_1, %c0_2], %0 {strides = array<i32>} : memref<1x128xf32, #tpu.memory_space<vmem>>, vector<1x128xf32>,
    return
  }
  func.func @transform_0(%arg0: i32, %arg1: i32) -> (i32, i32) {
    %c0_i32 = arith.constant 0 : i32
    return %arg0, %arg1 : i32, i32
  }
  func.func @transform_1(%arg0: i32, %arg1: i32) -> (i32, i32) {
    %c0_i32 = arith.constant 0 : i32
    return %arg0, %arg1 : i32, i32
  }
}

</mosaic_0001>

<llo_original>
// kernel: pixel_shuffle.1
$region0: #{pixel_shuffle.1}
  #allocation0 [shape = 'u32[]', space=smem, size = 0x4, offset = 0x4, fixed_abs, tag = 'smem constant byte address 0x4 - core index']
  #allocation1 [shape = 'u32[144,128]{1,0:T(1,128)}', space=vmem, size = 0x12000, scoped, tag = 'internal scratch']
  %s0 = inlined_call_operand.vmem [shape: f32[1,128], index: 0, kind: input, shape index: {}]
  %s1 = inlined_call_operand.vmem [shape: f32[1,128], index: 1, kind: output, shape index: {}]
  %s2 = sld [smem:[#allocation0]]
  $region14: #{pixel_shuffle.1} parent=0
    _
  %s4 = ssub.s32 1, %s2
  %s5 = scalar_select 0, %s4, %s2
  // Predicated region
  $region2: #{pixel_shuffle.1} parent=0 // pred_check
    _
  $region3: #{pixel_shuffle.1} parent=0 // pred_check_branch
    %7 = sbr.rel (0) target = $region5
  $region4: #{pixel_shuffle.1} parent=0 // pred_region
    _
  $region5: #{pixel_shuffle.1} parent=0 // pred_fallthru
    _
  %v8 = vld [vmem:[%s0] sm:$0x1]
  %9 = vst [vmem:[%s1] sm:$0x1] %v8
  // Predicated region
  $region6: #{pixel_shuffle.1} parent=0 // pred_check
    _
  $region7: #{pixel_shuffle.1} parent=0 // pred_check_branch
    %11 = sbr.rel (0) target = $region9
  $region8: #{pixel_shuffle.1} parent=0 // pred_region
    _
  $region9: #{pixel_shuffle.1} parent=0 // pred_fallthru
    _
  // Predicated region
  $region10: #{pixel_shuffle.1} parent=0 // pred_check
    _
  $region11: #{pixel_shuffle.1} parent=0 // pred_check_branch
    %13 = sbr.rel (0) target = $region13
  $region12: #{pixel_shuffle.1} parent=0 // pred_region
    _
  $region13: #{pixel_shuffle.1} parent=0 // pred_fallthru
    _

</llo_original>
